<compile_context>
chip_gen: v7x
topology: tpu7x:2x2x1
jax: 0.10.0
libtpu: 0.0.40
codegen_flags: <defaults>
</compile_context>

<pallas_src>
import functools

import jax
import jax.numpy as jnp
from jax.experimental import pallas as pl
from jax.experimental.pallas import tpu as pltpu

IN_DIM = 704    # = 5*128 + 64: last fc1 K-tile is a partial MXU pass. Left unpadded —
                # padding x to 768 would add ~9% HBM bytes for an MXU that is mostly idle.
HID_DIM = 64
HID_PAD = 128   # hidden dim zero-padded to a full lane tile
OUT_DIM = 128


def _round_up(n, m):
    return ((n + m - 1) // m) * m


def _select_config():
    """Generation-dependent batch-tile cap and VMEM limit."""
    try:
        vmem = pltpu.get_tpu_info().vmem_capacity_bytes
    except Exception:
        vmem = None
    if vmem is not None and vmem >= 96 * 1024 * 1024:
        # v5e / v6e: 128 MiB physical VMEM — go big and raise the scoped limit.
        return 4096, 64 * 1024 * 1024
    # v7x (64 MiB VMEM) or unknown chip: stay within the 32 MiB scoped default.
    # (bf16 x at tb=2048 double-buffered is ~12 MB total working set.)
    return 2048, 32 * 1024 * 1024


TILE_B_CAP, VMEM_LIMIT = _select_config()


def rl_l1_kernel(x_ref, w1_ref, b1_ref, w2_ref, b2_ref, o_ref):
    # ---- fc1 on the MXU: bf16 inputs, f32 accumulation ----
    x = x_ref[...].astype(jnp.bfloat16)      # no-op when the producer already feeds bf16
    h = jnp.dot(x, w1_ref[...], preferred_element_type=jnp.float32)
    h = h + b1_ref[...]                      # (tb, 128) + (1, 128)
    # sigmoid as a single EUP op: sigmoid(z) = 0.5*tanh(z/2) + 0.5
    # (pad columns give sigmoid(0)=0.5, but the matching w2 rows are zero)
    h = 0.5 * jnp.tanh(0.5 * h) + 0.5

    # TODO(synk): nn.Dropout(0.3) is identity in eval/inference mode; training-mode
    # masking (pltpu.prng_seed + pltpu.prng_random_bits) is intentionally not applied.

    # ---- fc2 (64->128, padded to 128->128): bf16 inputs, f32 accumulation ----
    logits = jnp.dot(h.astype(jnp.bfloat16), w2_ref[...],
                     preferred_element_type=jnp.float32)
    logits = logits + b2_ref[...]            # (tb, 128) + (1, 128)

    # ---- softmax over dim=1 (numerically stable, exact divide) ----
    m = jnp.max(logits, axis=-1, keepdims=True)
    e = jnp.exp(logits - m)
    denom = jnp.sum(e, axis=-1, keepdims=True)
    o_ref[...] = (e / denom).astype(o_ref.dtype)


def prepare_params(w1, b1, w2, b2):
    """One-time packing: zero-pad hidden dim 64->128 and cast weights to bf16."""
    w1p = jnp.zeros((IN_DIM, HID_PAD), jnp.float32).at[:, :HID_DIM].set(w1)
    b1p = jnp.zeros((1, HID_PAD), jnp.float32).at[:, :HID_DIM].set(b1.reshape(1, -1))
    w2p = jnp.zeros((HID_PAD, OUT_DIM), jnp.float32).at[:HID_DIM, :].set(w2)
    b2p = b2.reshape(1, OUT_DIM).astype(jnp.float32)
    return w1p.astype(jnp.bfloat16), b1p, w2p.astype(jnp.bfloat16), b2p


def _choose_tile_b(B):
    if B <= 8:
        return B                              # single full block (block dim == array dim)
    # at least 2 grid steps so both v7x TensorCores get work; cap by the gen-specific tile
    return min(TILE_B_CAP, _round_up(pl.cdiv(B, 2), 8))


@functools.partial(jax.jit, static_argnames=("out_dtype",))
def rl_l1_forward(x, w1p, b1p, w2p, b2p, out_dtype=jnp.float32):
    B = x.shape[0]
    tb = _choose_tile_b(B)
    grid = (pl.cdiv(B, tb),)                  # ragged last tile handled by edge blocks
    return pl.pallas_call(
        rl_l1_kernel,
        out_shape=jax.ShapeDtypeStruct((B, OUT_DIM), out_dtype),
        grid=grid,
        in_specs=[
            pl.BlockSpec((tb, IN_DIM), lambda i: (i, 0)),        # x: pipelined per tile
            pl.BlockSpec((IN_DIM, HID_PAD), lambda i: (0, 0)),   # weights/biases resident
            pl.BlockSpec((1, HID_PAD), lambda i: (0, 0)),
            pl.BlockSpec((HID_PAD, OUT_DIM), lambda i: (0, 0)),
            pl.BlockSpec((1, OUT_DIM), lambda i: (0, 0)),
        ],
        out_specs=pl.BlockSpec((tb, OUT_DIM), lambda i: (i, 0)),
        compiler_params=pltpu.CompilerParams(
            dimension_semantics=("parallel",),    # shard batch tiles across v7x's 2 TCs
            vmem_limit_bytes=VMEM_LIMIT,
        ),
    )(x, w1p, b1p, w2p, b2p)


def init_params(key):
    # torch.nn.Linear-style init: U(-1/sqrt(fan_in), 1/sqrt(fan_in)); weights stored
    # pre-transposed as (in_features, out_features).
    k1, k2, k3, k4 = jax.random.split(key, 4)
    bound1 = 1.0 / (IN_DIM ** 0.5)
    bound2 = 1.0 / (HID_DIM ** 0.5)
    w1 = jax.random.uniform(k1, (IN_DIM, HID_DIM), jnp.float32, -bound1, bound1)
    b1 = jax.random.uniform(k2, (HID_DIM,), jnp.float32, -bound1, bound1)
    w2 = jax.random.uniform(k3, (HID_DIM, OUT_DIM), jnp.float32, -bound2, bound2)
    b2 = jax.random.uniform(k4, (OUT_DIM,), jnp.float32, -bound2, bound2)
    return w1, b1, w2, b2


def reference_forward_f32(x, w1, b1, w2, b2):
    h = jax.nn.sigmoid(x @ w1 + b1)
    logits = h @ w2 + b2
    return jax.nn.softmax(logits, axis=1)


def reference_forward_bf16(x, w1p, b1p, w2p, b2p):
    # mirrors the kernel's bf16-input / f32-accumulate matmul numerics
    h = jnp.dot(x.astype(jnp.bfloat16), w1p, preferred_element_type=jnp.float32) + b1p
    h = jax.nn.sigmoid(h)
    logits = jnp.dot(h.astype(jnp.bfloat16), w2p,
                     preferred_element_type=jnp.float32) + b2p
    return jax.nn.softmax(logits, axis=1)


if __name__ == "__main__":
    key = jax.random.PRNGKey(0)
    kx, kp = jax.random.split(key)

    B = 8
    x_f32 = jax.random.normal(kx, (B, IN_DIM), dtype=jnp.float32)
    x_bf16 = x_f32.astype(jnp.bfloat16)   # preferred producer dtype (halves x HBM bytes)

    w1, b1, w2, b2 = init_params(kp)
    w1p, b1p, w2p, b2p = prepare_params(w1, b1, w2, b2)

    out = jax.block_until_ready(rl_l1_forward(x_bf16, w1p, b1p, w2p, b2p))

    ref_bf16 = reference_forward_bf16(x_f32, w1p, b1p, w2p, b2p)
    ref_f32 = reference_forward_f32(x_f32, w1, b1, w2, b2)

    assert out.shape == (B, OUT_DIM)
    assert bool(jnp.all(jnp.isfinite(out)))
    # vs bf16-matmul reference: only tanh-vs-exp sigmoid / accumulation-order noise
    assert jnp.allclose(out, ref_bf16, atol=1e-3, rtol=1e-2)
    # vs full-f32 reference: adds bf16 rounding of x and the two matmul inputs
    assert jnp.allclose(out, ref_f32, atol=3e-3, rtol=5e-2)
    # exact-divide softmax: rows sum to 1 within f32 rounding
    assert jnp.allclose(jnp.sum(out, axis=1), jnp.ones((B,)), atol=1e-3)

    # f32 caller fallback (in-kernel cast) + ragged-batch edge-block path (no jnp.pad)
    B2 = 20
    x2 = jax.random.normal(jax.random.PRNGKey(7), (B2, IN_DIM), dtype=jnp.float32)
    out2 = jax.block_until_ready(rl_l1_forward(x2, w1p, b1p, w2p, b2p))
    assert out2.shape == (B2, OUT_DIM)
    assert bool(jnp.all(jnp.isfinite(out2)))
    assert jnp.allclose(out2, reference_forward_f32(x2, w1, b1, w2, b2),
                        atol=3e-3, rtol=5e-2)

    print("KERNEL_OK")
</pallas_src>

<mosaic_0001>
module attributes {stable_mosaic.version = 11 : i64} {
  func.func @rl_l1_kernel(%arg0: i32, %arg1: memref<8x704xbf16, #tpu.memory_space<vmem>>, %arg2: memref<704x128xbf16, #tpu.memory_space<vmem>>, %arg3: memref<1x128xf32, #tpu.memory_space<vmem>>, %arg4: memref<128x128xbf16, #tpu.memory_space<vmem>>, %arg5: memref<1x128xf32, #tpu.memory_space<vmem>>, %arg6: memref<8x128xf32, #tpu.memory_space<vmem>>) attributes {dimension_semantics = [#tpu.dimension_semantics<parallel>], iteration_bounds = array<i64: 1>, scalar_prefetch = 0 : i64, scratch_operands = 0 : i64, tpu.core_type = #tpu.core_type<tc>, window_params = [{transform_indices = @transform_0, window_bounds = array<i64: 8, 704>}, {pipeline_mode = #tpu.pipeline_mode<synchronous>, transform_indices = @transform_1, window_bounds = array<i64: 704, 128>}, {pipeline_mode = #tpu.pipeline_mode<synchronous>, transform_indices = @transform_2, window_bounds = array<i64: 1, 128>}, {pipeline_mode = #tpu.pipeline_mode<synchronous>, transform_indices = @transform_3, window_bounds = array<i64: 128, 128>}, {pipeline_mode = #tpu.pipeline_mode<synchronous>, transform_indices = @transform_4, window_bounds = array<i64: 1, 128>}, {transform_indices = @transform_5, window_bounds = array<i64: 8, 128>}]} {
    %c0 = arith.constant 0 : index
    %c0_0 = arith.constant 0 : index
    %0 = vector.load %arg1[%c0, %c0_0] : memref<8x704xbf16, #tpu.memory_space<vmem>>, vector<8x704xbf16>
    %c0_1 = arith.constant 0 : index
    %c0_2 = arith.constant 0 : index
    %1 = vector.load %arg2[%c0_1, %c0_2] : memref<704x128xbf16, #tpu.memory_space<vmem>>, vector<704x128xbf16>
    %cst = arith.constant dense<0.000000e+00> : vector<8x128xf32>
    %2 = tpu.matmul %0, %1, %cst {dimension_numbers = #tpu.dot_dimension_numbers<[1], [0], [0], [1], [0, 0, 1, 1], [], []>} : vector<8x704xbf16>, vector<704x128xbf16>, vector<8x128xf32> -> vector<8x128xf32>
    %c0_3 = arith.constant 0 : index
    %c0_4 = arith.constant 0 : index
    %3 = vector.load %arg3[%c0_3, %c0_4] : memref<1x128xf32, #tpu.memory_space<vmem>>, vector<1x128xf32>
    %4 = vector.broadcast %3 : vector<1x128xf32> to vector<8x128xf32>
    %5 = arith.addf %2, %4 : vector<8x128xf32>
    %cst_5 = arith.constant 5.000000e-01 : f32
    %6 = vector.broadcast %cst_5 : f32 to vector<8x128xf32>
    %7 = arith.mulf %6, %5 : vector<8x128xf32>
    %8 = math.tanh %7 : vector<8x128xf32>
    %cst_6 = arith.constant 5.000000e-01 : f32
    %9 = vector.broadcast %cst_6 : f32 to vector<8x128xf32>
    %10 = arith.mulf %9, %8 : vector<8x128xf32>
    %cst_7 = arith.constant 5.000000e-01 : f32
    %11 = vector.broadcast %cst_7 : f32 to vector<8x128xf32>
    %12 = arith.addf %10, %11 : vector<8x128xf32>
    %13 = arith.truncf %12 : vector<8x128xf32> to vector<8x128xbf16>
    %c0_8 = arith.constant 0 : index
    %c0_9 = arith.constant 0 : index
    %14 = vector.load %arg4[%c0_8, %c0_9] : memref<128x128xbf16, #tpu.memory_space<vmem>>, vector<128x128xbf16>
    %cst_10 = arith.constant dense<0.000000e+00> : vector<8x128xf32>
    %15 = tpu.matmul %13, %14, %cst_10 {dimension_numbers = #tpu.dot_dimension_numbers<[1], [0], [0], [1], [0, 0, 1, 1], [], []>} : vector<8x128xbf16>, vector<128x128xbf16>, vector<8x128xf32> -> vector<8x128xf32>
    %c0_11 = arith.constant 0 : index
    %c0_12 = arith.constant 0 : index
    %16 = vector.load %arg5[%c0_11, %c0_12] : memref<1x128xf32, #tpu.memory_space<vmem>>, vector<1x128xf32>
    %17 = vector.broadcast %16 : vector<1x128xf32> to vector<8x128xf32>
    %18 = arith.addf %15, %17 : vector<8x128xf32>
    %cst_13 = arith.constant dense<0xFF800000> : vector<8xf32>
    %19 = vector.multi_reduction <maximumf>, %18, %cst_13 [1] : vector<8x128xf32> to vector<8xf32>
    %20 = vector.shape_cast %19 : vector<8xf32> to vector<8x1xf32>
    %21 = vector.broadcast %20 : vector<8x1xf32> to vector<8x128xf32>
    %22 = arith.subf %18, %21 : vector<8x128xf32>
    %23 = math.exp %22 : vector<8x128xf32>
    %cst_14 = arith.constant dense<0.000000e+00> : vector<8xf32>
    %24 = vector.multi_reduction <add>, %23, %cst_14 [1] : vector<8x128xf32> to vector<8xf32>
    %25 = vector.shape_cast %24 : vector<8xf32> to vector<8x1xf32>
    %26 = vector.broadcast %25 : vector<8x1xf32> to vector<8x128xf32>
    %27 = arith.divf %23, %26 : vector<8x128xf32>
    %c0_15 = arith.constant 0 : index
    %c0_16 = arith.constant 0 : index
    %28 = vector.load %arg6[%c0_15, %c0_16] : memref<8x128xf32, #tpu.memory_space<vmem>>, vector<8x128xf32>
    tpu.vector_store %arg6[%c0_15, %c0_16], %27 {strides = array<i32>} : memref<8x128xf32, #tpu.memory_space<vmem>>, vector<8x128xf32>,
    return
  }
  func.func @transform_0(%arg0: i32) -> (i32, i32) {
    %c0_i32 = arith.constant 0 : i32
    %c0_i32_0 = arith.constant 0 : i32
    return %arg0, %c0_i32 : i32, i32
  }
  func.func @transform_1(%arg0: i32) -> (i32, i32) {
    %c0_i32 = arith.constant 0 : i32
    %c0_i32_0 = arith.constant 0 : i32
    %c0_i32_1 = arith.constant 0 : i32
    return %c0_i32, %c0_i32_0 : i32, i32
  }
  func.func @transform_2(%arg0: i32) -> (i32, i32) {
    %c0_i32 = arith.constant 0 : i32
    %c0_i32_0 = arith.constant 0 : i32
    %c0_i32_1 = arith.constant 0 : i32
    return %c0_i32, %c0_i32_0 : i32, i32
  }
  func.func @transform_3(%arg0: i32) -> (i32, i32) {
    %c0_i32 = arith.constant 0 : i32
    %c0_i32_0 = arith.constant 0 : i32
    %c0_i32_1 = arith.constant 0 : i32
    return %c0_i32, %c0_i32_0 : i32, i32
  }
  func.func @transform_4(%arg0: i32) -> (i32, i32) {
    %c0_i32 = arith.constant 0 : i32
    %c0_i32_0 = arith.constant 0 : i32
    %c0_i32_1 = arith.constant 0 : i32
    return %c0_i32, %c0_i32_0 : i32, i32
  }
  func.func @transform_5(%arg0: i32) -> (i32, i32) {
    %c0_i32 = arith.constant 0 : i32
    %c0_i32_0 = arith.constant 0 : i32
    return %arg0, %c0_i32 : i32, i32
  }
}

</mosaic_0001>

<llo_original>
// kernel: rl_l1_forward.1
$region0: #{rl_l1_forward.1}
  #allocation0 [shape = 'u32[]', space=smem, size = 0x4, offset = 0x4, fixed_abs, tag = 'smem constant byte address 0x4 - core index']
  #allocation1 [shape = 'u32[144,128]{1,0:T(1,128)}', space=vmem, size = 0x12000, scoped, tag = 'internal scratch']
  %s0 = inlined_call_operand.hbm [shape: bf16[8,704], index: 0, kind: input, shape index: {}]
  %s1 = inlined_call_operand.hbm [shape: bf16[704,128], index: 1, kind: input, shape index: {}]
  %s2 = inlined_call_operand.vmem [shape: f32[1,128], index: 2, kind: input, shape index: {}]
  %s3 = inlined_call_operand.hbm [shape: bf16[128,128], index: 3, kind: input, shape index: {}]
  %s4 = inlined_call_operand.vmem [shape: f32[1,128], index: 4, kind: input, shape index: {}]
  %s5 = inlined_call_operand.hbm [shape: f32[8,128], index: 5, kind: output, shape index: {}]
  %s6 = sld [smem:[#allocation0]]
  $region42: #{rl_l1_forward.1} parent=0
    _
  %s8 = ssub.s32 1, %s6
  %s9 = scalar_select 0, %s8, %s6
  $region1: #{rl_l1_forward.1} parent=0
    #allocation2 [shape = 'u8[12288]{0}', space=vmem, size = 0x3000, scoped, tag = 'input window, operand 0, single buffered']
    #allocation3 [shape = 's32[1]{0}', space=sflag, size = 0x4, scoped, tag = 'scoped memory for rl_l1_forward.1']
    #allocation4 [shape = 's32[1]{0}', space=sflag, size = 0x4, scoped, tag = 'scoped memory for rl_l1_forward.1']
    #allocation5 [shape = 'u8[180224]{0}', space=vmem, size = 0x2c000, scoped, tag = 'input window, operand 1, single buffered']
    #allocation6 [shape = 's32[1]{0}', space=sflag, size = 0x4, scoped, tag = 'scoped memory for rl_l1_forward.1']
    #allocation7 [shape = 'u8[32768]{0}', space=vmem, size = 0x8000, scoped, tag = 'input window, operand 3, single buffered']
    #allocation8 [shape = 'u8[4096]{0}', space=vmem, size = 0x1000, scoped, tag = 'output window, operand 0, single buffered']
    %10 = vsyncpa [#allocation3], 0
    %11 = vsyncpa [#allocation6], 0
    %12 = vsyncpa [#allocation4], 0
    // Predicated region
    $region2: #{rl_l1_forward.1} parent=1 // pred_check
      _
    $region3: #{rl_l1_forward.1} parent=1 // pred_check_branch
      %14 = sbr.rel (0) target = $region5
    $region4: #{rl_l1_forward.1} parent=1 // pred_region
      %s16 = ssub.s32 384, 384
      %17 = vsyncadd [#allocation3], %s16
      %s19 = sshll.u32 [#allocation2], 4
      %s20 = int_to_ptr.vmem [resolvable:$true] %s19
      %22 = dma.hbm_to_vmem [thread:$0]  %s0, 384, %s20, [#allocation3]
    $region5: #{rl_l1_forward.1} parent=1 // pred_fallthru
      _
    // Predicated region
    $region6: #{rl_l1_forward.1} parent=1 // pred_check
      _
    $region7: #{rl_l1_forward.1} parent=1 // pred_check_branch
      %24 = sbr.rel (0) target = $region9
    $region8: #{rl_l1_forward.1} parent=1 // pred_region
      %s26 = ssub.s32 5632, 5632
      %27 = vsyncadd [#allocation6], %s26
      %s28 = sshll.u32 [#allocation5], 4
      %s29 = int_to_ptr.vmem [resolvable:$true] %s28
      %34 = dma.hbm_to_vmem [thread:$0]  %s1, 5632, %s29, [#allocation6], 64, 64, 4
    $region9: #{rl_l1_forward.1} parent=1 // pred_fallthru
      _
    // Predicated region
    $region10: #{rl_l1_forward.1} parent=1 // pred_check
      _
    $region11: #{rl_l1_forward.1} parent=1 // pred_check_branch
      %36 = sbr.rel (0) target = $region13
    $region12: #{rl_l1_forward.1} parent=1 // pred_region
      _
    $region13: #{rl_l1_forward.1} parent=1 // pred_fallthru
      _
    // Predicated region
    $region14: #{rl_l1_forward.1} parent=1 // pred_check
      _
    $region15: #{rl_l1_forward.1} parent=1 // pred_check_branch
      %38 = sbr.rel (0) target = $region17
    $region16: #{rl_l1_forward.1} parent=1 // pred_region
      %s40 = ssub.s32 1024, 1024
      %41 = vsyncadd [#allocation6], %s40
      %s42 = sshll.u32 [#allocation7], 4
      %s43 = int_to_ptr.vmem [resolvable:$true] %s42
      %48 = dma.hbm_to_vmem [thread:$0]  %s3, 1024, %s43, [#allocation6], 64, 64, 4
    $region17: #{rl_l1_forward.1} parent=1 // pred_fallthru
      _
    // Predicated region
    $region18: #{rl_l1_forward.1} parent=1 // pred_check
      _
    $region19: #{rl_l1_forward.1} parent=1 // pred_check_branch
      %50 = sbr.rel (0) target = $region21
    $region20: #{rl_l1_forward.1} parent=1 // pred_region
      _
    $region21: #{rl_l1_forward.1} parent=1 // pred_fallthru
      _
    // Predicated region
    $region22: #{rl_l1_forward.1} parent=1 // pred_check
      _
    $region23: #{rl_l1_forward.1} parent=1 // pred_check_branch
      %52 = sbr.rel (0) target = $region25
    $region24: #{rl_l1_forward.1} parent=1 // pred_region
      %53 = dma.done [#allocation3], 384
    $region25: #{rl_l1_forward.1} parent=1 // pred_fallthru
      _
    // Predicated region
    $region26: #{rl_l1_forward.1} parent=1 // pred_check
      _
    $region27: #{rl_l1_forward.1} parent=1 // pred_check_branch
      %55 = sbr.rel (0) target = $region29
    $region28: #{rl_l1_forward.1} parent=1 // pred_region
      %56 = dma.done [#allocation6], 5632
    $region29: #{rl_l1_forward.1} parent=1 // pred_fallthru
      _
    // Predicated region
    $region30: #{rl_l1_forward.1} parent=1 // pred_check
      _
    $region31: #{rl_l1_forward.1} parent=1 // pred_check_branch
      %58 = sbr.rel (0) target = $region33
    $region32: #{rl_l1_forward.1} parent=1 // pred_region
      %59 = dma.done [#allocation6], 1024
    $region33: #{rl_l1_forward.1} parent=1 // pred_fallthru
      _
    %v61 = vld [vmem:[#allocation2] sm:$0xff]
    %v62 = vld [vmem:[#allocation2 + $0x8] sm:$0xff]
    %v63 = vld [vmem:[#allocation2 + $0x10] sm:$0xff]
    %v64 = vld [vmem:[#allocation5] sm:$0xf]
    %v65 = vld [vmem:[#allocation5 + $0x4] sm:$0xf]
    %v66 = vld [vmem:[#allocation5 + $0x8] sm:$0xf]
    %v67 = vld [vmem:[#allocation5 + $0xc] sm:$0xf]
    %v68 = vld [vmem:[#allocation5 + $0x10] sm:$0xf]
    %v69 = vld [vmem:[#allocation5 + $0x14] sm:$0xf]
    %v70 = vld [vmem:[#allocation5 + $0x18] sm:$0xf]
    %v71 = vld [vmem:[#allocation5 + $0x1c] sm:$0xf]
    %v72 = vld [vmem:[#allocation5 + $0x20] sm:$0xf]
    %v73 = vld [vmem:[#allocation5 + $0x24] sm:$0xf]
    %v74 = vld [vmem:[#allocation5 + $0x28] sm:$0xf]
    %v75 = vld [vmem:[#allocation5 + $0x2c] sm:$0xf]
    %v76 = vld [vmem:[#allocation5 + $0x30] sm:$0xf]
    %v77 = vld [vmem:[#allocation5 + $0x34] sm:$0xf]
    %v78 = vld [vmem:[#allocation5 + $0x38] sm:$0xf]
    %v79 = vld [vmem:[#allocation5 + $0x3c] sm:$0xf]
    %v80 = vld [vmem:[#allocation5 + $0x40] sm:$0xf]
    %v81 = vld [vmem:[#allocation5 + $0x44] sm:$0xf]
    %v82 = vld [vmem:[#allocation5 + $0x48] sm:$0xf]
    %v83 = vld [vmem:[#allocation5 + $0x4c] sm:$0xf]
    %v84 = vld [vmem:[#allocation5 + $0x50] sm:$0xf]
    %v85 = vld [vmem:[#allocation5 + $0x54] sm:$0xf]
    %v86 = vld [vmem:[#allocation5 + $0x58] sm:$0xf]
    %v87 = vld [vmem:[#allocation5 + $0x5c] sm:$0xf]
    %v88 = vld [vmem:[#allocation5 + $0x60] sm:$0xf]
    %v89 = vld [vmem:[#allocation5 + $0x64] sm:$0xf]
    %v90 = vld [vmem:[#allocation5 + $0x68] sm:$0xf]
    %v91 = vld [vmem:[#allocation5 + $0x6c] sm:$0xf]
    %v92 = vld [vmem:[#allocation5 + $0x70] sm:$0xf]
    %v93 = vld [vmem:[#allocation5 + $0x74] sm:$0xf]
    %v94 = vld [vmem:[#allocation5 + $0x78] sm:$0xf]
    %v95 = vld [vmem:[#allocation5 + $0x7c] sm:$0xf]
    %v96 = vld [vmem:[#allocation5 + $0x80] sm:$0xf]
    %v97 = vld [vmem:[#allocation5 + $0x84] sm:$0xf]
    %v98 = vld [vmem:[#allocation5 + $0x88] sm:$0xf]
    %v99 = vld [vmem:[#allocation5 + $0x8c] sm:$0xf]
    %v100 = vld [vmem:[#allocation5 + $0x90] sm:$0xf]
    %v101 = vld [vmem:[#allocation5 + $0x94] sm:$0xf]
    %v102 = vld [vmem:[#allocation5 + $0x98] sm:$0xf]
    %v103 = vld [vmem:[#allocation5 + $0x9c] sm:$0xf]
    %v104 = vld [vmem:[#allocation5 + $0xa0] sm:$0xf]
    %v105 = vld [vmem:[#allocation5 + $0xa4] sm:$0xf]
    %v106 = vld [vmem:[#allocation5 + $0xa8] sm:$0xf]
    %v107 = vld [vmem:[#allocation5 + $0xac] sm:$0xf]
    %v108 = vld [vmem:[#allocation5 + $0xb0] sm:$0xf]
    %v109 = vld [vmem:[#allocation5 + $0xb4] sm:$0xf]
    %v110 = vld [vmem:[#allocation5 + $0xb8] sm:$0xf]
    %v111 = vld [vmem:[#allocation5 + $0xbc] sm:$0xf]
    %v112 = vld [vmem:[#allocation5 + $0xc0] sm:$0xf]
    %v113 = vld [vmem:[#allocation5 + $0xc4] sm:$0xf]
    %v114 = vld [vmem:[#allocation5 + $0xc8] sm:$0xf]
    %v115 = vld [vmem:[#allocation5 + $0xcc] sm:$0xf]
    %v116 = vld [vmem:[#allocation5 + $0xd0] sm:$0xf]
    %v117 = vld [vmem:[#allocation5 + $0xd4] sm:$0xf]
    %v118 = vld [vmem:[#allocation5 + $0xd8] sm:$0xf]
    %v119 = vld [vmem:[#allocation5 + $0xdc] sm:$0xf]
    %v120 = vld [vmem:[#allocation5 + $0xe0] sm:$0xf]
    %v121 = vld [vmem:[#allocation5 + $0xe4] sm:$0xf]
    %v122 = vld [vmem:[#allocation5 + $0xe8] sm:$0xf]
    %v123 = vld [vmem:[#allocation5 + $0xec] sm:$0xf]
    %v124 = vld [vmem:[#allocation5 + $0xf0] sm:$0xf]
    %v125 = vld [vmem:[#allocation5 + $0xf4] sm:$0xf]
    %v126 = vld [vmem:[#allocation5 + $0xf8] sm:$0xf]
    %v127 = vld [vmem:[#allocation5 + $0xfc] sm:$0xf]
    %v128 = vld [vmem:[#allocation5 + $0x100] sm:$0xf]
    %v129 = vld [vmem:[#allocation5 + $0x104] sm:$0xf]
    %v130 = vld [vmem:[#allocation5 + $0x108] sm:$0xf]
    %v131 = vld [vmem:[#allocation5 + $0x10c] sm:$0xf]
    %v132 = vld [vmem:[#allocation5 + $0x110] sm:$0xf]
    %v133 = vld [vmem:[#allocation5 + $0x114] sm:$0xf]
    %v134 = vld [vmem:[#allocation5 + $0x118] sm:$0xf]
    %v135 = vld [vmem:[#allocation5 + $0x11c] sm:$0xf]
    %v136 = vld [vmem:[#allocation5 + $0x120] sm:$0xf]
    %v137 = vld [vmem:[#allocation5 + $0x124] sm:$0xf]
    %v138 = vld [vmem:[#allocation5 + $0x128] sm:$0xf]
    %v139 = vld [vmem:[#allocation5 + $0x12c] sm:$0xf]
    %v140 = vld [vmem:[#allocation5 + $0x130] sm:$0xf]
    %v141 = vld [vmem:[#allocation5 + $0x134] sm:$0xf]
    %v142 = vld [vmem:[#allocation5 + $0x138] sm:$0xf]
    %v143 = vld [vmem:[#allocation5 + $0x13c] sm:$0xf]
    %v144 = vld [vmem:[#allocation5 + $0x140] sm:$0xf]
    %v145 = vld [vmem:[#allocation5 + $0x144] sm:$0xf]
    %v146 = vld [vmem:[#allocation5 + $0x148] sm:$0xf]
    %v147 = vld [vmem:[#allocation5 + $0x14c] sm:$0xf]
    %v148 = vld [vmem:[#allocation5 + $0x150] sm:$0xf]
    %v149 = vld [vmem:[#allocation5 + $0x154] sm:$0xf]
    %v150 = vld [vmem:[#allocation5 + $0x158] sm:$0xf]
    %v151 = vld [vmem:[#allocation5 + $0x15c] sm:$0xf]
    %v152 = vld [vmem:[%s2] sm:$0x1]
    %v154 = vlaneseq
    %v155 = vshrl.u32 %v154, 7
    %v156 = vsub.s32 0, %v155
    %v157 = vrot.slane %v152, %v156
    %v162 = vunpack.c.l.b16 %v61
    %v163 = vunpack.c.h.b16 %v61
    %v164 = vunpack.c.l.b16 %v62
    %v165 = vunpack.c.h.b16 %v62
    %v166 = vunpack.c.l.b16 %v63
    %v167 = vunpack.c.h.b16 %v63
    %v168 = vpack.c.b16 %v162, %v162
    %v169 = vpack.c.b16 %v163, %v163
    %v170 = vpack.c.b16 %v164, %v164
    %v171 = vpack.c.b16 %v165, %v165
    %v172 = vpack.c.b16 %v166, %v166
    %v173 = vpack.c.b16 %v167, %v167
    %v267 = vunpack.c.l.b16 %v64
    %v268 = vunpack.c.l.b16 %v65
    %v269 = vunpack.c.l.b16 %v66
    %v270 = vunpack.c.l.b16 %v67
    %v271 = vunpack.c.l.b16 %v68
    %v272 = vunpack.c.l.b16 %v69
    %v273 = vunpack.c.l.b16 %v70
    %v274 = vunpack.c.l.b16 %v71
    %v275 = vunpack.c.l.b16 %v72
    %v276 = vunpack.c.l.b16 %v73
    %v277 = vunpack.c.l.b16 %v74
    %v278 = vunpack.c.l.b16 %v75
    %v279 = vunpack.c.l.b16 %v76
    %v280 = vunpack.c.l.b16 %v77
    %v281 = vunpack.c.l.b16 %v78
    %v282 = vunpack.c.l.b16 %v79
    %v283 = vunpack.c.l.b16 %v80
    %v284 = vunpack.c.l.b16 %v81
    %v285 = vunpack.c.l.b16 %v82
    %v286 = vunpack.c.l.b16 %v83
    %v287 = vunpack.c.l.b16 %v84
    %v288 = vunpack.c.l.b16 %v85
    %v289 = vunpack.c.l.b16 %v86
    %v290 = vunpack.c.l.b16 %v87
    %v291 = vunpack.c.l.b16 %v88
    %v292 = vunpack.c.l.b16 %v89
    %v293 = vunpack.c.l.b16 %v90
    %v294 = vunpack.c.l.b16 %v91
    %v295 = vunpack.c.l.b16 %v92
    %v296 = vunpack.c.l.b16 %v93
    %v297 = vunpack.c.l.b16 %v94
    %v298 = vunpack.c.l.b16 %v95
    %v299 = vunpack.c.l.b16 %v96
    %v300 = vunpack.c.l.b16 %v97
    %v301 = vunpack.c.l.b16 %v98
    %v302 = vunpack.c.l.b16 %v99
    %v303 = vunpack.c.l.b16 %v100
    %v304 = vunpack.c.l.b16 %v101
    %v305 = vunpack.c.l.b16 %v102
    %v306 = vunpack.c.l.b16 %v103
    %v307 = vunpack.c.l.b16 %v104
    %v308 = vunpack.c.l.b16 %v105
    %v309 = vunpack.c.l.b16 %v106
    %v310 = vunpack.c.l.b16 %v107
    %v311 = vunpack.c.l.b16 %v108
    %v312 = vunpack.c.l.b16 %v109
    %v313 = vunpack.c.l.b16 %v110
    %v314 = vunpack.c.l.b16 %v111
    %v315 = vunpack.c.l.b16 %v112
    %v316 = vunpack.c.l.b16 %v113
    %v317 = vunpack.c.l.b16 %v114
    %v318 = vunpack.c.l.b16 %v115
    %v319 = vunpack.c.l.b16 %v116
    %v320 = vunpack.c.l.b16 %v117
    %v321 = vunpack.c.l.b16 %v118
    %v322 = vunpack.c.l.b16 %v119
    %v323 = vunpack.c.l.b16 %v120
    %v324 = vunpack.c.l.b16 %v121
    %v325 = vunpack.c.l.b16 %v122
    %v326 = vunpack.c.l.b16 %v123
    %v327 = vunpack.c.l.b16 %v124
    %v328 = vunpack.c.l.b16 %v125
    %v329 = vunpack.c.l.b16 %v126
    %v330 = vunpack.c.l.b16 %v127
    %v331 = vunpack.c.l.b16 %v128
    %v332 = vunpack.c.l.b16 %v129
    %v333 = vunpack.c.l.b16 %v130
    %v334 = vunpack.c.l.b16 %v131
    %v335 = vunpack.c.l.b16 %v132
    %v336 = vunpack.c.l.b16 %v133
    %v337 = vunpack.c.l.b16 %v134
    %v338 = vunpack.c.l.b16 %v135
    %v339 = vunpack.c.l.b16 %v136
    %v340 = vunpack.c.l.b16 %v137
    %v341 = vunpack.c.l.b16 %v138
    %v342 = vunpack.c.l.b16 %v139
    %v343 = vunpack.c.l.b16 %v140
    %v344 = vunpack.c.l.b16 %v141
    %v345 = vunpack.c.l.b16 %v142
    %v346 = vunpack.c.l.b16 %v143
    %v347 = vunpack.c.l.b16 %v144
    %v348 = vunpack.c.l.b16 %v145
    %v349 = vunpack.c.l.b16 %v146
    %v350 = vunpack.c.l.b16 %v147
    %v351 = vunpack.c.l.b16 %v148
    %v352 = vunpack.c.l.b16 %v149
    %v353 = vunpack.c.l.b16 %v150
    %v354 = vunpack.c.l.b16 %v151
    %v355 = vpack.c.b16 %v268, %v267
    %v356 = vpack.c.b16 %v270, %v269
    %v357 = vpack.c.b16 %v272, %v271
    %v358 = vpack.c.b16 %v274, %v273
    %v359 = vpack.c.b16 %v276, %v275
    %v360 = vpack.c.b16 %v278, %v277
    %v361 = vpack.c.b16 %v280, %v279
    %v362 = vpack.c.b16 %v282, %v281
    %v363 = vpack.c.b16 %v284, %v283
    %v364 = vpack.c.b16 %v286, %v285
    %v365 = vpack.c.b16 %v288, %v287
    %v366 = vpack.c.b16 %v290, %v289
    %v367 = vpack.c.b16 %v292, %v291
    %v368 = vpack.c.b16 %v294, %v293
    %v369 = vpack.c.b16 %v296, %v295
    %v370 = vpack.c.b16 %v298, %v297
    %v371 = vpack.c.b16 %v300, %v299
    %v372 = vpack.c.b16 %v302, %v301
    %v373 = vpack.c.b16 %v304, %v303
    %v374 = vpack.c.b16 %v306, %v305
    %v375 = vpack.c.b16 %v308, %v307
    %v376 = vpack.c.b16 %v310, %v309
    %v377 = vpack.c.b16 %v312, %v311
    %v378 = vpack.c.b16 %v314, %v313
    %v379 = vpack.c.b16 %v316, %v315
    %v380 = vpack.c.b16 %v318, %v317
    %v381 = vpack.c.b16 %v320, %v319
    %v382 = vpack.c.b16 %v322, %v321
    %v383 = vpack.c.b16 %v324, %v323
    %v384 = vpack.c.b16 %v326, %v325
    %v385 = vpack.c.b16 %v328, %v327
    %v386 = vpack.c.b16 %v330, %v329
    %v387 = vpack.c.b16 %v332, %v331
    %v388 = vpack.c.b16 %v334, %v333
    %v389 = vpack.c.b16 %v336, %v335
    %v390 = vpack.c.b16 %v338, %v337
    %v391 = vpack.c.b16 %v340, %v339
    %v392 = vpack.c.b16 %v342, %v341
    %v393 = vpack.c.b16 %v344, %v343
    %v394 = vpack.c.b16 %v346, %v345
    %v395 = vpack.c.b16 %v348, %v347
    %v396 = vpack.c.b16 %v350, %v349
    %v397 = vpack.c.b16 %v352, %v351
    %v398 = vpack.c.b16 %v354, %v353
    %vm443 = vcmask 523264
    %v445 = vsel %vm443, %v173, 0
    %447 = vmatprep.subr.bf16.mxu0 0
    %448 = vmatpush1.bf16.msra.mxu0 %v355
    %449 = vmatprep.subr.bf16.mxu0 0
    %450 = vmatpush1.bf16.msra.mxu0 %v356
    %451 = vmatprep.subr.bf16.mxu0 0
    %452 = vmatpush1.bf16.msra.mxu0 %v357
    %453 = vmatprep.subr.bf16.mxu0 0
    %454 = vmatpush1.bf16.msra.mxu0 %v358
    %455 = vmatprep.subr.bf16.mxu0 0
    %456 = vmatpush1.bf16.msra.mxu0 %v359
    %457 = vmatprep.subr.bf16.mxu0 0
    %458 = vmatpush1.bf16.msra.mxu0 %v360
    %459 = vmatprep.subr.bf16.mxu0 0
    %460 = vmatpush1.bf16.msra.mxu0 %v361
    %461 = vmatprep.subr.bf16.mxu0 0
    %462 = vmatpush1.bf16.msra.mxu0 %v362
    %463 = vmatprep.subr.bf16.mxu0 0
    %464 = vmatpush1.bf16.msra.mxu0 %v363
    %465 = vmatprep.subr.bf16.mxu0 0
    %466 = vmatpush1.bf16.msra.mxu0 %v364
    %467 = vmatprep.subr.bf16.mxu0 0
    %468 = vmatpush1.bf16.msra.mxu0 %v365
    %469 = vmatprep.subr.bf16.mxu0 0
    %470 = vmatpush1.bf16.msra.mxu0 %v366
    %471 = vmatprep.subr.bf16.mxu0 0
    %472 = vmatpush1.bf16.msra.mxu0 %v367
    %473 = vmatprep.subr.bf16.mxu0 0
    %474 = vmatpush1.bf16.msra.mxu0 %v368
    %475 = vmatprep.subr.bf16.mxu0 0
    %476 = vmatpush1.bf16.msra.mxu0 %v369
    %477 = vmatprep.subr.bf16.mxu0 0
    %478 = vmatpush1.bf16.msra.mxu0 %v370
    %479 = vmatprep.mubr.bf16.mxu0 %v169
    %480 = vmatmul.mubr.bf16.gmra.mrb[0].mxu0 %v168
    %v481 = vpop.f32.mrb[0].mxu0
    %v482 = vadd.f32 %v157, %v481
    %v483 = vpop.f32.mrb[0].mxu0
    %v484 = vpop.f32.mrb[0].mxu0
    %v485 = vpop.f32.mrb[0].mxu0
    %486 = vdwg.mxu0
    %487 = vmatprep.subr.bf16.mxu0 0
    %488 = vmatpush1.bf16.msra.mxu0 %v371
    %489 = vmatprep.subr.bf16.mxu0 0
    %490 = vmatpush1.bf16.msra.mxu0 %v372
    %491 = vmatprep.subr.bf16.mxu0 0
    %492 = vmatpush1.bf16.msra.mxu0 %v373
    %493 = vmatprep.subr.bf16.mxu0 0
    %494 = vmatpush1.bf16.msra.mxu0 %v374
    %495 = vmatprep.subr.bf16.mxu0 0
    %496 = vmatpush1.bf16.msra.mxu0 %v375
    %497 = vmatprep.subr.bf16.mxu0 0
    %498 = vmatpush1.bf16.msra.mxu0 %v376
    %499 = vmatprep.subr.bf16.mxu0 0
    %500 = vmatpush1.bf16.msra.mxu0 %v377
    %501 = vmatprep.subr.bf16.mxu0 0
    %502 = vmatpush1.bf16.msra.mxu0 %v378
    %503 = vmatprep.subr.bf16.mxu0 0
    %504 = vmatpush1.bf16.msra.mxu0 %v379
    %505 = vmatprep.subr.bf16.mxu0 0
    %506 = vmatpush1.bf16.msra.mxu0 %v380
    %507 = vmatprep.subr.bf16.mxu0 0
    %508 = vmatpush1.bf16.msra.mxu0 %v381
    %509 = vmatprep.subr.bf16.mxu0 0
    %510 = vmatpush1.bf16.msra.mxu0 %v382
    %511 = vmatprep.subr.bf16.mxu0 0
    %512 = vmatpush1.bf16.msra.mxu0 %v383
    %513 = vmatprep.subr.bf16.mxu0 0
    %514 = vmatpush1.bf16.msra.mxu0 %v384
    %515 = vmatprep.subr.bf16.mxu0 0
    %516 = vmatpush1.bf16.msra.mxu0 %v385
    %517 = vmatprep.subr.bf16.mxu0 0
    %518 = vmatpush1.bf16.msra.mxu0 %v386
    %519 = vmatprep.mubr.bf16.mxu0 %v171
    %520 = vmatmul.mubr.bf16.gmra.mrb[0].mxu0 %v170
    %v521 = vpop.f32.mrb[0].mxu0
    %v522 = vadd.f32 %v482, %v521
    %v523 = vpop.f32.mrb[0].mxu0
    %v524 = vpop.f32.mrb[0].mxu0
    %v525 = vpop.f32.mrb[0].mxu0
    %526 = vdwg.mxu0
    %527 = vmatprep.subr.bf16.mxu0 0
    %528 = vmatpush1.bf16.msra.mxu0 %v387
    %529 = vmatprep.subr.bf16.mxu0 0
    %530 = vmatpush1.bf16.msra.mxu0 %v388
    %531 = vmatprep.subr.bf16.mxu0 0
    %532 = vmatpush1.bf16.msra.mxu0 %v389
    %533 = vmatprep.subr.bf16.mxu0 0
    %534 = vmatpush1.bf16.msra.mxu0 %v390
    %535 = vmatprep.subr.bf16.mxu0 0
    %536 = vmatpush1.bf16.msra.mxu0 %v391
    %537 = vmatprep.subr.bf16.mxu0 0
    %538 = vmatpush1.bf16.msra.mxu0 %v392
    %539 = vmatprep.subr.bf16.mxu0 0
    %540 = vmatpush1.bf16.msra.mxu0 %v393
    %541 = vmatprep.subr.bf16.mxu0 0
    %542 = vmatpush1.bf16.msra.mxu0 %v394
    %543 = vmatprep.subr.bf16.mxu0 0
    %544 = vmatpush1.bf16.msra.mxu0 %v395
    %545 = vmatprep.subr.bf16.mxu0 0
    %546 = vmatpush1.bf16.msra.mxu0 %v396
    %547 = vmatprep.subr.bf16.mxu0 0
    %548 = vmatpush1.bf16.msra.mxu0 %v397
    %549 = vmatprep.subr.bf16.mxu0 0
    %550 = vmatpush1.bf16.msra.mxu0 %v398
    %551 = vmatprep.subr.bf16.mxu0 0
    %552 = vmatpush1.bf16.msra.mxu0 0
    %553 = vmatprep.subr.bf16.mxu0 0
    %554 = vmatpush1.bf16.msra.mxu0 0
    %555 = vmatprep.subr.bf16.mxu0 0
    %556 = vmatpush1.bf16.msra.mxu0 0
    %557 = vmatprep.subr.bf16.mxu0 0
    %558 = vmatpush1.bf16.msra.mxu0 0
    %559 = vmatprep.mubr.bf16.mxu0 %v445
    %560 = vmatmul.mubr.bf16.gmra.mrb[0].mxu0 %v172
    %v561 = vpop.f32.mrb[0].mxu0
    %v562 = vadd.f32 %v522, %v561
    %v563 = vpop.f32.mrb[0].mxu0
    %v564 = vpop.f32.mrb[0].mxu0
    %v565 = vpop.f32.mrb[0].mxu0
    %566 = vdwg.mxu0
    %v567 = vmul.f32 %v562, 0.5
    %v568 = vtanh.pop %v567
    %v569 = vmul.f32 %v568, 0.5
    %v570 = vadd.f32 %v569, 0.5
    %v571 = vpack.c.bf16 %v570, %v570
    %v572 = vld [vmem:[#allocation7] sm:$0xf]
    %v573 = vld [vmem:[#allocation7 + $0x4] sm:$0xf]
    %v574 = vld [vmem:[#allocation7 + $0x8] sm:$0xf]
    %v575 = vld [vmem:[#allocation7 + $0xc] sm:$0xf]
    %v576 = vld [vmem:[#allocation7 + $0x10] sm:$0xf]
    %v577 = vld [vmem:[#allocation7 + $0x14] sm:$0xf]
    %v578 = vld [vmem:[#allocation7 + $0x18] sm:$0xf]
    %v579 = vld [vmem:[#allocation7 + $0x1c] sm:$0xf]
    %v580 = vld [vmem:[#allocation7 + $0x20] sm:$0xf]
    %v581 = vld [vmem:[#allocation7 + $0x24] sm:$0xf]
    %v582 = vld [vmem:[#allocation7 + $0x28] sm:$0xf]
    %v583 = vld [vmem:[#allocation7 + $0x2c] sm:$0xf]
    %v584 = vld [vmem:[#allocation7 + $0x30] sm:$0xf]
    %v585 = vld [vmem:[#allocation7 + $0x34] sm:$0xf]
    %v586 = vld [vmem:[#allocation7 + $0x38] sm:$0xf]
    %v587 = vld [vmem:[#allocation7 + $0x3c] sm:$0xf]
    %v588 = vld [vmem:[%s4] sm:$0x1]
    %v590 = vlaneseq
    %v591 = vshrl.u32 %v590, 7
    %v592 = vsub.s32 0, %v591
    %v593 = vrot.slane %v588, %v592
    %v611 = vunpack.c.l.b16 %v572
    %v612 = vunpack.c.l.b16 %v573
    %v613 = vunpack.c.l.b16 %v574
    %v614 = vunpack.c.l.b16 %v575
    %v615 = vunpack.c.l.b16 %v576
    %v616 = vunpack.c.l.b16 %v577
    %v617 = vunpack.c.l.b16 %v578
    %v618 = vunpack.c.l.b16 %v579
    %v619 = vunpack.c.l.b16 %v580
    %v620 = vunpack.c.l.b16 %v581
    %v621 = vunpack.c.l.b16 %v582
    %v622 = vunpack.c.l.b16 %v583
    %v623 = vunpack.c.l.b16 %v584
    %v624 = vunpack.c.l.b16 %v585
    %v625 = vunpack.c.l.b16 %v586
    %v626 = vunpack.c.l.b16 %v587
    %v627 = vpack.c.b16 %v612, %v611
    %v628 = vpack.c.b16 %v614, %v613
    %v629 = vpack.c.b16 %v616, %v615
    %v630 = vpack.c.b16 %v618, %v617
    %v631 = vpack.c.b16 %v620, %v619
    %v632 = vpack.c.b16 %v622, %v621
    %v633 = vpack.c.b16 %v624, %v623
    %v634 = vpack.c.b16 %v626, %v625
    %643 = vmatprep.subr.bf16.mxu0 0
    %644 = vmatpush1.bf16.msra.mxu0 %v627
    %645 = vmatprep.subr.bf16.mxu0 0
    %646 = vmatpush1.bf16.msra.mxu0 %v628
    %647 = vmatprep.subr.bf16.mxu0 0
    %648 = vmatpush1.bf16.msra.mxu0 %v629
    %649 = vmatprep.subr.bf16.mxu0 0
    %650 = vmatpush1.bf16.msra.mxu0 %v630
    %651 = vmatprep.subr.bf16.mxu0 0
    %652 = vmatpush1.bf16.msra.mxu0 %v631
    %653 = vmatprep.subr.bf16.mxu0 0
    %654 = vmatpush1.bf16.msra.mxu0 %v632
    %655 = vmatprep.subr.bf16.mxu0 0
    %656 = vmatpush1.bf16.msra.mxu0 %v633
    %657 = vmatprep.subr.bf16.mxu0 0
    %658 = vmatpush1.bf16.msra.mxu0 %v634
    %659 = vmatprep.subr.bf16.mxu0 0
    %660 = vmatpush1.bf16.msra.mxu0 0
    %661 = vmatprep.subr.bf16.mxu0 0
    %662 = vmatpush1.bf16.msra.mxu0 0
    %663 = vmatprep.subr.bf16.mxu0 0
    %664 = vmatpush1.bf16.msra.mxu0 0
    %665 = vmatprep.subr.bf16.mxu0 0
    %666 = vmatpush1.bf16.msra.mxu0 0
    %667 = vmatprep.subr.bf16.mxu0 0
    %668 = vmatpush1.bf16.msra.mxu0 0
    %669 = vmatprep.subr.bf16.mxu0 0
    %670 = vmatpush1.bf16.msra.mxu0 0
    %671 = vmatprep.subr.bf16.mxu0 0
    %672 = vmatpush1.bf16.msra.mxu0 0
    %673 = vmatprep.subr.bf16.mxu0 0
    %674 = vmatpush1.bf16.msra.mxu0 0
    %675 = vmatprep.mubr.bf16.mxu0 0
    %676 = vmatmul.mubr.bf16.gmra.mrb[0].mxu0 %v571
    %v677 = vpop.f32.mrb[0].mxu0
    %v678 = vadd.f32 %v593, %v677
    %v679 = vpop.f32.mrb[0].mxu0
    %v680 = vpop.f32.mrb[0].mxu0
    %v681 = vpop.f32.mrb[0].mxu0
    %682 = vdwg.mxu0
    %683 = vmax.xlane.f32.xlu0 %v678
    %v684 = vpop.xlane.xlu0 %683
    %v685 = vsub.f32 %v678, %v684
    %v686 = vmul.f32 %v685, 1.442695
    %v687 = vpow.pop %v686
    %688 = vadd.xlane.f32.xlu0 %v687
    %v689 = vpop.xlane.xlu0 %688
    %v690 = vrcp.pop %v689
    %v691 = vmul.f32 %v687, %v690
    %692 = vst [vmem:[#allocation8] sm:$0xff] %v691
    // Predicated region
    $region34: #{rl_l1_forward.1} parent=1 // pred_check
      _
    $region35: #{rl_l1_forward.1} parent=1 // pred_check_branch
      %694 = sbr.rel (0) target = $region37
    $region36: #{rl_l1_forward.1} parent=1 // pred_region
      %s696 = ssub.s32 128, 128
      %697 = vsyncadd [#allocation4], %s696
      %s699 = sshll.u32 [#allocation8], 4
      %s700 = int_to_ptr.vmem [resolvable:$true] %s699
      %702 = dma.vmem_to_hbm [thread:$0]  %s700, 128, %s5, [#allocation4]
    $region37: #{rl_l1_forward.1} parent=1 // pred_fallthru
      _
    // Predicated region
    $region38: #{rl_l1_forward.1} parent=1 // pred_check
      _
    $region39: #{rl_l1_forward.1} parent=1 // pred_check_branch
      %704 = sbr.rel (0) target = $region41
    $region40: #{rl_l1_forward.1} parent=1 // pred_region
      %705 = dma.done [#allocation4], 128
    $region41: #{rl_l1_forward.1} parent=1 // pred_fallthru
      _
    %706 = vsyncpa [#allocation3], 1
    %707 = vsyncpa [#allocation6], 1
    %708 = vsyncpa [#allocation4], 1

</llo_original>
